<compile_context>
chip_gen: v7x
topology: tpu7x:2x2x1
jax: 0.10.0
libtpu: 0.0.40
codegen_flags: <defaults>
</compile_context>

<pallas_src>
import functools

import jax
import jax.numpy as jnp
from jax.experimental import pallas as pl
from jax.experimental.pallas import tpu as pltpu

LANE = 128
# rows of 128 lanes per block: 4096 rows * 128 * 4B = 2 MiB per f32 block.
TARGET_BLOCK_ROWS = 4096


def _round_up(a, b):
    return ((a + b - 1) // b) * b


def _neuron_kernel(coef_ref, x_ref, o_ref, vd_ref, vs_ref):
    # coef_ref : SMEM (5,) f32 = [sig(a1)-0.5, sig(b1)-0.5, sig(a2)+0.5, sig(b2)+0.5, v_th]
    # x_ref/o_ref : VMEM (block_rows, LANE) f32 — one timestep slab of one spatial tile.
    # vd_ref/vs_ref : VMEM scratch carrying the recurrent state across the T grid axis.
    t = pl.program_id(1)
    c1 = coef_ref[0]
    c2 = coef_ref[1]
    c3 = coef_ref[2]
    c4 = coef_ref[3]
    vth = coef_ref[4]

    @pl.when(t == 0)
    def _():
        vd_ref[...] = jnp.zeros_like(vd_ref)                 # 0.0 * v_th
        vs_ref[...] = jnp.zeros_like(vs_ref) + 0.5 * vth     # 0.5 * v_th

    v_d = c1 * vd_ref[...] + c2 * vs_ref[...] + x_ref[...]
    v_s = c3 * vs_ref[...] + c4 * v_d
    # SurrogateFunction.forward: (v_s - v_th >= 0) * v_th, as a single cmp+select.
    out = jnp.where(v_s - vth >= 0.0, vth, 0.0)
    vd_ref[...] = v_d
    vs_ref[...] = v_s - out
    o_ref[...] = out.astype(o_ref.dtype)


def learnable_neuron_forward(x, alpha_1, beta_1, alpha_2, beta_2, v_threshold, T):
    """x: (T*B, C, H, W) float32 -> (T*B, C, H, W) float32 (use_TEBN path)."""
    TB, C, H, W = x.shape
    assert TB % T == 0
    B = TB // T
    N = B * C * H * W

    # Parameter glue (plain JAX): scalar sigmoids on the learnable gates.
    def _scalar(p):
        return jnp.asarray(p, jnp.float32).reshape(())

    coefs = jnp.stack([
        jax.nn.sigmoid(_scalar(alpha_1)) - 0.5,
        jax.nn.sigmoid(_scalar(beta_1)) - 0.5,
        jax.nn.sigmoid(_scalar(alpha_2)) + 0.5,
        jax.nn.sigmoid(_scalar(beta_2)) + 0.5,
        _scalar(v_threshold),
    ]).astype(jnp.float32)

    # Lane-dense tiling of the per-timestep tensor: (B*C*H*W) -> (rows, 128).
    rows = pl.cdiv(N, LANE)
    num_tiles = pl.cdiv(rows, TARGET_BLOCK_ROWS)
    if num_tiles == 1:
        # Single tile: block equals the full (rows, LANE) extent, no (8,128) constraint.
        block_rows = rows
        rows_padded = rows
    else:
        # Multiple tiles: block rows must be sublane (8) aligned; pad by at most a few
        # rows instead of up to a whole block.
        block_rows = _round_up(pl.cdiv(rows, num_tiles), 8)
        rows_padded = num_tiles * block_rows
    n_padded = rows_padded * LANE

    x_flat = x.reshape(T, N).astype(jnp.float32)
    if n_padded != N:
        # TODO(synk): handle the ragged tail inside the kernel (masked pltpu.store) to
        # drop this extra HBM pass; the pad is at most a few sublane rows per tile.
        x_flat = jnp.pad(x_flat, ((0, 0), (0, n_padded - N)))
    x3 = x_flat.reshape(T, rows_padded, LANE)

    block_bytes = block_rows * LANE * 4
    # 2x double-buffered input + 2x output + 2 state scratch buffers, plus margin.
    vmem_limit = int(min(max(6 * block_bytes + (2 << 20), 16 << 20), 40 << 20))

    out3 = pl.pallas_call(
        _neuron_kernel,
        out_shape=jax.ShapeDtypeStruct((T, rows_padded, LANE), jnp.float32),
        grid=(num_tiles, T),
        in_specs=[
            pl.BlockSpec(memory_space=pltpu.MemorySpace.SMEM),               # coefs
            pl.BlockSpec((None, block_rows, LANE), lambda i, t: (t, i, 0)),  # x[t] tile
        ],
        out_specs=pl.BlockSpec((None, block_rows, LANE), lambda i, t: (t, i, 0)),
        scratch_shapes=[
            pltpu.VMEM((block_rows, LANE), jnp.float32),   # v_d state
            pltpu.VMEM((block_rows, LANE), jnp.float32),   # v_s state
        ],
        compiler_params=pltpu.CompilerParams(
            dimension_semantics=("parallel", "arbitrary"),
            vmem_limit_bytes=vmem_limit,
        ),
    )(coefs, x3)

    out = out3.reshape(T, n_padded)
    if n_padded != N:
        out = out[:, :N]
    out = out.reshape(T, B, C, H, W)
    # MergeTemporalDim: flatten(0, 1)
    return out.reshape(T * B, C, H, W)


def _reference(x, alpha_1, beta_1, alpha_2, beta_2, v_threshold, T):
    TB, C, H, W = x.shape
    B = TB // T
    xs = x.reshape(T, B, C, H, W)
    c1 = jax.nn.sigmoid(alpha_1) - 0.5
    c2 = jax.nn.sigmoid(beta_1) - 0.5
    c3 = jax.nn.sigmoid(alpha_2) + 0.5
    c4 = jax.nn.sigmoid(beta_2) + 0.5
    v_d = jnp.zeros_like(xs[0])
    v_s = jnp.ones_like(xs[0]) * 0.5 * v_threshold
    outs = []
    for t in range(T):
        v_d = c1 * v_d + c2 * v_s + xs[t]
        v_s = c3 * v_s + c4 * v_d
        out = (v_s - v_threshold >= 0).astype(jnp.float32) * v_threshold
        v_s = v_s - out
        outs.append(out)
    return jnp.stack(outs, 0).reshape(T * B, C, H, W)


if __name__ == "__main__":
    T, B, C, H, W = 4, 2, 4, 16, 16
    key = jax.random.PRNGKey(0)
    x = jax.random.normal(key, (T * B, C, H, W), dtype=jnp.float32)

    # Deterministic parameter init, matching the module's __init__ defaults.
    scale = 1.0
    v_threshold = jnp.float32(scale)
    alpha_1 = jnp.float32(0.0)
    beta_1 = jnp.float32(0.0)
    alpha_2 = jnp.float32(0.0)
    beta_2 = jnp.float32(0.0)

    fwd = jax.jit(functools.partial(learnable_neuron_forward, T=T))
    y = fwd(x, alpha_1, beta_1, alpha_2, beta_2, v_threshold)
    jax.block_until_ready(y)

    y_ref = _reference(x, alpha_1, beta_1, alpha_2, beta_2, v_threshold, T)
    assert y.shape == (T * B, C, H, W)
    assert jnp.allclose(y, y_ref, atol=1e-5, rtol=1e-5)

    print("KERNEL_OK")
</pallas_src>

<mosaic_0001>
module attributes {stable_mosaic.version = 11 : i64} {
  func.func @_neuron_kernel(%arg0: i32, %arg1: i32, %arg2: memref<5xf32, #tpu.memory_space<smem>>, %arg3: memref<1x16x128xf32, #tpu.memory_space<vmem>>, %arg4: memref<1x16x128xf32, #tpu.memory_space<vmem>>, %arg5: memref<16x128xf32, #tpu.memory_space<vmem>>, %arg6: memref<16x128xf32, #tpu.memory_space<vmem>>) attributes {dimension_semantics = [#tpu.dimension_semantics<parallel>, #tpu.dimension_semantics<arbitrary>], iteration_bounds = array<i64: 1, 4>, scalar_prefetch = 0 : i64, scratch_operands = 2 : i64, tpu.core_type = #tpu.core_type<tc>, window_params = [{transform_indices = @transform_0, window_bounds = array<i64: 5>}, {transform_indices = @transform_1, window_bounds = array<i64: 1, 16, 128>}, {transform_indices = @transform_2, window_bounds = array<i64: 1, 16, 128>}]} {
    %c0 = arith.constant 0 : index
    %0 = memref.load %arg2[%c0] : memref<5xf32, #tpu.memory_space<smem>>
    %c1 = arith.constant 1 : index
    %1 = memref.load %arg2[%c1] : memref<5xf32, #tpu.memory_space<smem>>
    %c2 = arith.constant 2 : index
    %2 = memref.load %arg2[%c2] : memref<5xf32, #tpu.memory_space<smem>>
    %c3 = arith.constant 3 : index
    %3 = memref.load %arg2[%c3] : memref<5xf32, #tpu.memory_space<smem>>
    %c4 = arith.constant 4 : index
    %4 = memref.load %arg2[%c4] : memref<5xf32, #tpu.memory_space<smem>>
    %c0_i32 = arith.constant 0 : i32
    %5 = arith.cmpi eq, %arg1, %c0_i32 : i32
    %6 = arith.extui %5 : i1 to i32
    %c0_i32_0 = arith.constant 0 : i32
    %7 = arith.cmpi ne, %6, %c0_i32_0 : i32
    scf.if %7 {
      %cst_18 = arith.constant 0.000000e+00 : f32
      %37 = vector.broadcast %cst_18 : f32 to vector<16x128xf32>
      %c0_19 = arith.constant 0 : index
      %c0_20 = arith.constant 0 : index
      %38 = vector.load %arg5[%c0_19, %c0_20] : memref<16x128xf32, #tpu.memory_space<vmem>>, vector<16x128xf32>
      tpu.vector_store %arg5[%c0_19, %c0_20], %37 {strides = array<i32>} : memref<16x128xf32, #tpu.memory_space<vmem>>, vector<16x128xf32>,
      %cst_21 = arith.constant 0.000000e+00 : f32
      %39 = vector.broadcast %cst_21 : f32 to vector<16x128xf32>
      %cst_22 = arith.constant 5.000000e-01 : f32
      %40 = arith.mulf %cst_22, %4 : f32
      %41 = vector.broadcast %40 : f32 to vector<16x128xf32>
      %42 = arith.addf %39, %41 : vector<16x128xf32>
      %c0_23 = arith.constant 0 : index
      %c0_24 = arith.constant 0 : index
      %43 = vector.load %arg6[%c0_23, %c0_24] : memref<16x128xf32, #tpu.memory_space<vmem>>, vector<16x128xf32>
      tpu.vector_store %arg6[%c0_23, %c0_24], %42 {strides = array<i32>} : memref<16x128xf32, #tpu.memory_space<vmem>>, vector<16x128xf32>,
    } else {
    }
    %c0_1 = arith.constant 0 : index
    %c0_2 = arith.constant 0 : index
    %8 = vector.load %arg5[%c0_1, %c0_2] : memref<16x128xf32, #tpu.memory_space<vmem>>, vector<16x128xf32>
    %9 = vector.broadcast %0 : f32 to vector<16x128xf32>
    %10 = arith.mulf %9, %8 : vector<16x128xf32>
    %c0_3 = arith.constant 0 : index
    %c0_4 = arith.constant 0 : index
    %11 = vector.load %arg6[%c0_3, %c0_4] : memref<16x128xf32, #tpu.memory_space<vmem>>, vector<16x128xf32>
    %12 = vector.broadcast %1 : f32 to vector<16x128xf32>
    %13 = arith.mulf %12, %11 : vector<16x128xf32>
    %14 = arith.addf %10, %13 : vector<16x128xf32>
    %c0_5 = arith.constant 0 : index
    %c0_6 = arith.constant 0 : index
    %c0_7 = arith.constant 0 : index
    %15 = vector.load %arg3[%c0_5, %c0_6, %c0_7] : memref<1x16x128xf32, #tpu.memory_space<vmem>>, vector<1x16x128xf32>
    %16 = vector.shape_cast %15 : vector<1x16x128xf32> to vector<16x128xf32>
    %17 = arith.addf %14, %16 : vector<16x128xf32>
    %c0_8 = arith.constant 0 : index
    %c0_9 = arith.constant 0 : index
    %18 = vector.load %arg6[%c0_8, %c0_9] : memref<16x128xf32, #tpu.memory_space<vmem>>, vector<16x128xf32>
    %19 = vector.broadcast %2 : f32 to vector<16x128xf32>
    %20 = arith.mulf %19, %18 : vector<16x128xf32>
    %21 = vector.broadcast %3 : f32 to vector<16x128xf32>
    %22 = arith.mulf %21, %17 : vector<16x128xf32>
    %23 = arith.addf %20, %22 : vector<16x128xf32>
    %24 = vector.broadcast %4 : f32 to vector<16x128xf32>
    %25 = arith.subf %23, %24 : vector<16x128xf32>
    %cst = arith.constant 0.000000e+00 : f32
    %26 = vector.broadcast %cst : f32 to vector<16x128xf32>
    %27 = arith.cmpf oge, %25, %26 : vector<16x128xf32>
    %cst_10 = arith.constant 0.000000e+00 : f32
    %28 = vector.broadcast %4 : f32 to vector<16x128xf32>
    %29 = vector.broadcast %cst_10 : f32 to vector<16x128xf32>
    %30 = arith.select %27, %28, %29 : vector<16x128xi1>, vector<16x128xf32>
    %c0_11 = arith.constant 0 : index
    %c0_12 = arith.constant 0 : index
    %31 = vector.load %arg5[%c0_11, %c0_12] : memref<16x128xf32, #tpu.memory_space<vmem>>, vector<16x128xf32>
    tpu.vector_store %arg5[%c0_11, %c0_12], %17 {strides = array<i32>} : memref<16x128xf32, #tpu.memory_space<vmem>>, vector<16x128xf32>,
    %32 = arith.subf %23, %30 : vector<16x128xf32>
    %c0_13 = arith.constant 0 : index
    %c0_14 = arith.constant 0 : index
    %33 = vector.load %arg6[%c0_13, %c0_14] : memref<16x128xf32, #tpu.memory_space<vmem>>, vector<16x128xf32>
    tpu.vector_store %arg6[%c0_13, %c0_14], %32 {strides = array<i32>} : memref<16x128xf32, #tpu.memory_space<vmem>>, vector<16x128xf32>,
    %c0_15 = arith.constant 0 : index
    %c0_16 = arith.constant 0 : index
    %c0_17 = arith.constant 0 : index
    %34 = vector.load %arg4[%c0_15, %c0_16, %c0_17] : memref<1x16x128xf32, #tpu.memory_space<vmem>>, vector<1x16x128xf32>
    %35 = vector.shape_cast %34 : vector<1x16x128xf32> to vector<16x128xf32>
    %36 = vector.shape_cast %30 : vector<16x128xf32> to vector<1x16x128xf32>
    tpu.vector_store %arg4[%c0_15, %c0_16, %c0_17], %36 {strides = array<i32>} : memref<1x16x128xf32, #tpu.memory_space<vmem>>, vector<1x16x128xf32>,
    return
  }
  func.func @transform_0(%arg0: i32, %arg1: i32) -> i32 {
    %c0_i32 = arith.constant 0 : i32
    %c0_i32_0 = arith.constant 0 : i32
    return %c0_i32 : i32
  }
  func.func @transform_1(%arg0: i32, %arg1: i32) -> (i32, i32, i32) {
    %c0_i32 = arith.constant 0 : i32
    %c0_i32_0 = arith.constant 0 : i32
    return %arg1, %arg0, %c0_i32 : i32, i32, i32
  }
  func.func @transform_2(%arg0: i32, %arg1: i32) -> (i32, i32, i32) {
    %c0_i32 = arith.constant 0 : i32
    %c0_i32_0 = arith.constant 0 : i32
    return %arg1, %arg0, %c0_i32 : i32, i32, i32
  }
}

</mosaic_0001>

<llo_original>
// kernel: learnable_neuron_forward.1
$region0: #{learnable_neuron_forward.1}
  #allocation0 [shape = 'u32[]', space=smem, size = 0x4, offset = 0x4, fixed_abs, tag = 'smem constant byte address 0x4 - core index']
  #allocation1 [shape = 'u32[144,128]{1,0:T(1,128)}', space=vmem, size = 0x12000, scoped, tag = 'internal scratch']
  #allocation2 [shape = 'f32[16,128]{1,0:T(8,128)}', space=vmem, size = 0x2000, scoped, tag = 'scratch operand']
  #allocation3 [shape = 'f32[16,128]{1,0:T(8,128)}', space=vmem, size = 0x2000, scoped, tag = 'scratch operand']
  %s0 = inlined_call_operand.vmem [shape: f32[5], index: 0, kind: input, shape index: {}]
  %s1 = inlined_call_operand.vmem [shape: f32[4,16,128], index: 1, kind: input, shape index: {}]
  %s2 = inlined_call_operand.vmem [shape: f32[4,16,128], index: 2, kind: output, shape index: {}]
  %s3 = sld [smem:[#allocation0]]
  $region49: #{learnable_neuron_forward.1} parent=0
    _
  %s5 = ssub.s32 1, %s3
  %s6 = scalar_select 0, %s5, %s3
  $region1: #{learnable_neuron_forward.1} parent=0
    #allocation4 [shape = 'u8[512]{0}', space=smem, size = 0x200, scoped, tag = 'input window, operand 0, single buffered']
    #allocation5 [shape = 's32[2]{0}', space=sflag, size = 0x8, scoped, tag = 'scoped memory for learnable_neuron_forward.1']
    %7 = vsyncpa [#allocation5], 0
    loop: start=0, step=1, limit=6
    $region2: #{learnable_neuron_forward.1} parent=1 // loop_pre_header
      _
    $region3: #{learnable_neuron_forward.1} parent=1 // loop_header
      %s9 = sphi 0, %s13
      %p10 = scmp.ge.s32.totalorder %s9, 6
      %s16 = sphi 0, %s28
      %s17 = sphi 0, %s24
      %s18 = sphi 0, %s16
      %s19 = sphi 0, %s17
      %s20 = sphi 0, %s18
      %s21 = sphi 0, %s19
      %s29 = sphi 0, %s29
      %s31 = sphi 0, %s29
      %s32 = sphi 0, %s31
      %s46 = sphi 0, %s32
      %s54 = sphi 0, %s56
      %s57 = sphi 0, %s54
      %s58 = sphi 0, %s57
      %s74 = sphi 0, %s58
      %s82 = sphi 0, %s84
      %s85 = sphi 0, %s82
      %s86 = sphi 0, %s85
      %s102 = sphi 0, %s86
    $region4: #{learnable_neuron_forward.1} parent=1 // loop_header_branch
      %12 = sbr.rel (%p10) target = $region8
    $region5: #{learnable_neuron_forward.1} parent=1 // loop_body
      %s14 = ssub.s32 %s9, 1
      %s15 = ssub.s32 %s9, 2
      %s22 = sadd.s32 1, %s17
      %p23 = scmp.ge.s32.totalorder %s22, 4
      %s24 = scalar_select %p23, 0, %s22
      %s25 = sadd.s32 1, %s16
      %s26 = scalar_select %p23, %s25, %s16
      %p27 = scmp.ge.s32.totalorder %s26, 1
      %s28 = scalar_select %p27, 0, %s26
      %s30 = sadd.s32 %s29, 1
      %p33 = scmp.eq.s32.totalorder %s9, 3
      %p34 = scmp.ne.s32.totalorder %s29, %s31
      %p35 = scmp.eq.s32.totalorder %s9, 0
      %p36 = por %p34, %p35
      %p37 = scmp.ne.s32.totalorder %s29, %s31
      %p38 = scmp.eq.s32.totalorder %s14, 3
      %p39 = por %p37, %p38
      %p40 = scmp.ne.s32.totalorder %s31, %s32
      %p41 = scmp.eq.s32.totalorder %s14, 0
      %p42 = por %p40, %p41
      %p43 = scmp.ne.s32.totalorder %s31, %s32
      %p44 = scmp.eq.s32.totalorder %s15, 3
      %p45 = por %p43, %p44
      %p47 = scmp.ne.s32.totalorder %s32, %s46
      %p48 = scmp.eq.s32.totalorder %s15, 0
      %p49 = por %p47, %p48
      %s50 = ssub.s32 %s17, %s24
      %s51 = ssub.s32 %s16, %s28
      %s52 = sor.u32 %s50, %s51
      %p53 = scmp.eq.s32.totalorder %s52, 0
      %s55 = sadd.s32 %s54, 1
      %s56 = scalar_select %p53, %s54, %s55
      %p59 = pneg %p53
      %p60 = scmp.eq.s32.totalorder %s9, 3
      %p61 = por %p59, %p60
      %p62 = scmp.ne.s32.totalorder %s54, %s57
      %p63 = scmp.eq.s32.totalorder %s9, 0
      %p64 = por %p62, %p63
      %p65 = scmp.ne.s32.totalorder %s54, %s57
      %p66 = scmp.eq.s32.totalorder %s14, 3
      %p67 = por %p65, %p66
      %p68 = scmp.ne.s32.totalorder %s57, %s58
      %p69 = scmp.eq.s32.totalorder %s14, 0
      %p70 = por %p68, %p69
      %p71 = scmp.ne.s32.totalorder %s57, %s58
      %p72 = scmp.eq.s32.totalorder %s15, 3
      %p73 = por %p71, %p72
      %p75 = scmp.ne.s32.totalorder %s58, %s74
      %p76 = scmp.eq.s32.totalorder %s15, 0
      %p77 = por %p75, %p76
      %s78 = ssub.s32 %s17, %s24
      %s79 = ssub.s32 %s16, %s28
      %s80 = sor.u32 %s78, %s79
      %p81 = scmp.eq.s32.totalorder %s80, 0
      %s83 = sadd.s32 %s82, 1
      %s84 = scalar_select %p81, %s82, %s83
      %p87 = pneg %p81
      %p88 = scmp.eq.s32.totalorder %s9, 3
      %p89 = por %p87, %p88
      %p90 = scmp.ne.s32.totalorder %s82, %s85
      %p91 = scmp.eq.s32.totalorder %s9, 0
      %p92 = por %p90, %p91
      %p93 = scmp.ne.s32.totalorder %s82, %s85
      %p94 = scmp.eq.s32.totalorder %s14, 3
      %p95 = por %p93, %p94
      %p96 = scmp.ne.s32.totalorder %s85, %s86
      %p97 = scmp.eq.s32.totalorder %s14, 0
      %p98 = por %p96, %p97
      %p99 = scmp.ne.s32.totalorder %s85, %s86
      %p100 = scmp.eq.s32.totalorder %s15, 3
      %p101 = por %p99, %p100
      %p103 = scmp.ne.s32.totalorder %s86, %s102
      %p104 = scmp.eq.s32.totalorder %s15, 0
      %p105 = por %p103, %p104
      %p106 = scmp.le.s32.totalorder 1, %s9
      %p107 = scmp.lt.s32.totalorder %s9, 5
      %p108 = pnand %p106, %p107
      %p109 = pneg %p108
      // Predicated region
      $region9: #{learnable_neuron_forward.1} parent=5 // pred_check
        _
      $region10: #{learnable_neuron_forward.1} parent=5 // pred_check_branch
        %111 = sbr.rel (%p108) target = $region12
      $region11: #{learnable_neuron_forward.1} parent=5 // pred_region
        %s112 = ssub.s32 %s9, 1
        // Predicated region
        $region13: #{learnable_neuron_forward.1} parent=11 // pred_check
          %p113 = pneg %p42
        $region14: #{learnable_neuron_forward.1} parent=11 // pred_check_branch
          %115 = sbr.rel (%p113) target = $region16
        $region15: #{learnable_neuron_forward.1} parent=11 // pred_region
          %s117 = ssub.s32 16, 16
          %118 = vsyncadd [#allocation5], %s117
          %s120 = sshll.u32 %s0, 4
          %s121 = int_to_ptr.vmem [resolvable:$true] %s120
          %123 = dma.vmem_to_smem %s121, 16, [#allocation4], [#allocation5]
        $region16: #{learnable_neuron_forward.1} parent=11 // pred_fallthru
          _
      $region12: #{learnable_neuron_forward.1} parent=5 // pred_fallthru
        _
      %p124 = scmp.lt.s32.totalorder %s9, 4
      // Predicated region
      $region17: #{learnable_neuron_forward.1} parent=5 // pred_check
        %p125 = pneg %p124
      $region18: #{learnable_neuron_forward.1} parent=5 // pred_check_branch
        %127 = sbr.rel (%p125) target = $region20
      $region19: #{learnable_neuron_forward.1} parent=5 // pred_region
        // Predicated region
        $region21: #{learnable_neuron_forward.1} parent=19 // pred_check
          %p128 = pneg %p64
        $region22: #{learnable_neuron_forward.1} parent=19 // pred_check_branch
          %130 = sbr.rel (%p128) target = $region24
        $region23: #{learnable_neuron_forward.1} parent=19 // pred_region
          %s131 = smul.u32 2, %s16
          %p132 = scmp.lt.s32.totalorder %s17, 3
          %s133 = scalar_select %p132, %s17, 3
          %p134 = scmp.lt.s32.totalorder %s131, 1
          %s135 = scalar_select %p134, %s131, 1
          %s136 = smul.addr %s133, 2
          %s137 = sadd.s32 %s135, %s136
          %s138 = smul.addr %s137, 8
          %s139 = scalar_lea.vmem %s1, %s138
          %s140 = smul.u32 2, %s16
        $region24: #{learnable_neuron_forward.1} parent=19 // pred_fallthru
          _
      $region20: #{learnable_neuron_forward.1} parent=5 // pred_fallthru
        _
      %p141 = scmp.le.s32.totalorder 1, %s9
      %p142 = scmp.lt.s32.totalorder %s9, 5
      %p143 = pnand %p141, %p142
      %p144 = pneg %p143
      // Predicated region
      $region25: #{learnable_neuron_forward.1} parent=5 // pred_check
        _
      $region26: #{learnable_neuron_forward.1} parent=5 // pred_check_branch
        %146 = sbr.rel (%p143) target = $region28
      $region27: #{learnable_neuron_forward.1} parent=5 // pred_region
        %s147 = ssub.s32 %s9, 1
        // Predicated region
        $region29: #{learnable_neuron_forward.1} parent=27 // pred_check
          %p148 = pneg %p42
        $region30: #{learnable_neuron_forward.1} parent=27 // pred_check_branch
          %150 = sbr.rel (%p148) target = $region32
        $region31: #{learnable_neuron_forward.1} parent=27 // pred_region
          %151 = dma.done [#allocation5], 16
        $region32: #{learnable_neuron_forward.1} parent=27 // pred_fallthru
          _
        %152 = sfence
        %p153 = pneg %p42
        %p154 = pneg %p39
        %s155 = smul.u32 2, %s18
        %p156 = scmp.lt.s32.totalorder %s19, 3
        %s157 = scalar_select %p156, %s19, 3
        %p158 = scmp.lt.s32.totalorder %s155, 1
        %s159 = scalar_select %p158, %s155, 1
        %s160 = smul.addr %s157, 2
        %s161 = sadd.s32 %s159, %s160
        %s162 = smul.addr %s161, 8
        %s163 = scalar_lea.vmem %s1, %s162
        %p164 = pneg %p70
        %p165 = pneg %p67
        %p166 = pneg %p98
        %p167 = pneg %p95
        %s168 = smul.u32 2, %s18
        %p169 = scmp.lt.s32.totalorder %s19, 3
        %s170 = scalar_select %p169, %s19, 3
        %p171 = scmp.lt.s32.totalorder %s168, 1
        %s172 = scalar_select %p171, %s168, 1
        %s173 = smul.addr %s170, 2
        %s174 = sadd.s32 %s172, %s173
        %s175 = smul.addr %s174, 8
        %s176 = scalar_lea.vmem %s2, %s175
        %s177 = smul.u32 2, %s18
        %p178 = scmp.lt.s32.totalorder %s19, 3
        %s179 = scalar_select %p178, %s19, 3
        %p180 = scmp.lt.s32.totalorder %s177, 1
        %s181 = scalar_select %p180, %s177, 1
        %s182 = smul.addr %s179, 2
        %s183 = sadd.s32 %s181, %s182
        %s184 = smul.addr %s183, 8
        %s185 = scalar_lea.vmem %s1, %s184
        %s186 = smul.u32 2, %s18
        %s187 = smul.u32 2, %s18
        %p188 = scmp.lt.s32.totalorder %s19, 3
        %s189 = scalar_select %p188, %s19, 3
        %p190 = scmp.lt.s32.totalorder %s187, 1
        %s191 = scalar_select %p190, %s187, 1
        %s192 = smul.addr %s189, 2
        %s193 = sadd.s32 %s191, %s192
        %s194 = smul.addr %s193, 8
        %s195 = scalar_lea.vmem %s2, %s194
        %s196 = smul.u32 2, %s18
        %s197 = sld [smem:[#allocation4]]
        %s198 = sld [smem:[#allocation4 + $0x1]]
        %s199 = sld [smem:[#allocation4 + $0x2]]
        %s200 = sld [smem:[#allocation4 + $0x3]]
        %s201 = sld [smem:[#allocation4 + $0x4]]
        %p202 = scmp.eq.s32.totalorder %s19, 0
        // Predicated region
        $region33: #{learnable_neuron_forward.1} parent=27 // pred_check
          %p203 = pneg %p202
        $region34: #{learnable_neuron_forward.1} parent=27 // pred_check_branch
          %205 = sbr.rel (%p203) target = $region36
        $region35: #{learnable_neuron_forward.1} parent=27 // pred_region
          %206 = vst [vmem:[#allocation2] sm:$0xff] 0.0
          %207 = vst [vmem:[#allocation2 + $0x8] sm:$0xff] 0.0
          %s208 = smul.f32 %s201, 0.5
          %v209 = vstv %s208
          %v210 = vadd.f32 %v209, 0.0
          %211 = vst [vmem:[#allocation3] sm:$0xff] %v210
          %212 = vst [vmem:[#allocation3 + $0x8] sm:$0xff] %v210
        $region36: #{learnable_neuron_forward.1} parent=27 // pred_fallthru
          _
        %v213 = vld [vmem:[#allocation2] sm:$0xff]
        %v214 = vld [vmem:[#allocation2 + $0x8] sm:$0xff]
        %v215 = vstv %s197
        %v216 = vmul.f32 %v215, %v213
        %v217 = vmul.f32 %v215, %v214
        %v218 = vld [vmem:[#allocation3] sm:$0xff]
        %v219 = vld [vmem:[#allocation3 + $0x8] sm:$0xff]
        %v220 = vstv %s198
        %v221 = vmul.f32 %v220, %v218
        %v222 = vmul.f32 %v220, %v219
        %v223 = vadd.f32 %v216, %v221
        %v224 = vadd.f32 %v217, %v222
        %v225 = vld [vmem:[%s185] sm:$0xff]
        %v226 = vld [vmem:[%s185 + $0x8] sm:$0xff]
        %v227 = vadd.f32 %v223, %v225
        %v228 = vadd.f32 %v224, %v226
        %v229 = vstv %s199
        %v230 = vmul.f32 %v229, %v218
        %v231 = vmul.f32 %v229, %v219
        %v232 = vstv %s200
        %v233 = vmul.f32 %v232, %v227
        %v234 = vmul.f32 %v232, %v228
        %v235 = vadd.f32 %v230, %v233
        %v236 = vadd.f32 %v231, %v234
        %v237 = vstv %s201
        %v238 = vsub.f32 %v235, %v237
        %v239 = vsub.f32 %v236, %v237
        %vm240 = vcmp.ge.f32.partialorder %v238, 0.0
        %vm241 = vcmp.ge.f32.partialorder %v239, 0.0
        %v242 = vsel %vm240, %v237, 0.0
        %v243 = vsel %vm241, %v237, 0.0
        %244 = vst [vmem:[#allocation2] sm:$0xff] %v227
        %245 = vst [vmem:[#allocation2 + $0x8] sm:$0xff] %v228
        %v246 = vsub.f32 %v235, %v242
        %v247 = vsub.f32 %v236, %v243
        %248 = vst [vmem:[#allocation3] sm:$0xff] %v246
        %249 = vst [vmem:[#allocation3 + $0x8] sm:$0xff] %v247
        %250 = vst [vmem:[%s195] sm:$0xff] %v242
        %251 = vst [vmem:[%s195 + $0x8] sm:$0xff] %v243
        %s252 = smul.u32 2, %s18
        %p253 = scmp.lt.s32.totalorder %s19, 3
        %s254 = scalar_select %p253, %s19, 3
        %p255 = scmp.lt.s32.totalorder %s252, 1
        %s256 = scalar_select %p255, %s252, 1
        %s257 = smul.addr %s254, 2
        %s258 = sadd.s32 %s256, %s257
        %s259 = smul.addr %s258, 8
        %s260 = scalar_lea.vmem %s2, %s259
        // Predicated region
        $region37: #{learnable_neuron_forward.1} parent=27 // pred_check
          %p261 = pneg %p95
        $region38: #{learnable_neuron_forward.1} parent=27 // pred_check_branch
          %263 = sbr.rel (%p261) target = $region40
        $region39: #{learnable_neuron_forward.1} parent=27 // pred_region
          %s264 = smul.u32 2, %s18
        $region40: #{learnable_neuron_forward.1} parent=27 // pred_fallthru
          _
      $region28: #{learnable_neuron_forward.1} parent=5 // pred_fallthru
        _
      %p265 = scmp.le.s32.totalorder 2, %s9
      // Predicated region
      $region41: #{learnable_neuron_forward.1} parent=5 // pred_check
        %p266 = pneg %p265
      $region42: #{learnable_neuron_forward.1} parent=5 // pred_check_branch
        %268 = sbr.rel (%p266) target = $region44
      $region43: #{learnable_neuron_forward.1} parent=5 // pred_region
        %s269 = ssub.s32 %s9, 2
        // Predicated region
        $region45: #{learnable_neuron_forward.1} parent=43 // pred_check
          %p270 = pneg %p101
        $region46: #{learnable_neuron_forward.1} parent=43 // pred_check_branch
          %272 = sbr.rel (%p270) target = $region48
        $region47: #{learnable_neuron_forward.1} parent=43 // pred_region
          %s273 = smul.u32 2, %s20
          %p274 = scmp.lt.s32.totalorder %s21, 3
          %s275 = scalar_select %p274, %s21, 3
          %p276 = scmp.lt.s32.totalorder %s273, 1
          %s277 = scalar_select %p276, %s273, 1
          %s278 = smul.addr %s275, 2
          %s279 = sadd.s32 %s277, %s278
          %s280 = smul.addr %s279, 8
          %s281 = scalar_lea.vmem %s2, %s280
        $region48: #{learnable_neuron_forward.1} parent=43 // pred_fallthru
          _
      $region44: #{learnable_neuron_forward.1} parent=5 // pred_fallthru
        _
    $region6: #{learnable_neuron_forward.1} parent=1 // loop_footer
      %s13 = sadd.s32 1, %s9
    $region7: #{learnable_neuron_forward.1} parent=1 // loop_footer_branch
      %8 = sbr.rel target = $region3
    $region8: #{learnable_neuron_forward.1} parent=1 // loop_exit
      _
    %282 = vsyncpa [#allocation5], 1
    %s283 = scalar_lea.sflag [#allocation5], 1
    %284 = vsyncpa %s283, 1

</llo_original>
